<compile_context>
chip_gen: v7x
topology: tpu7x:2x2x1
jax: 0.10.0
libtpu: 0.0.40
codegen_flags: <defaults>
</compile_context>

<pallas_src>
import functools

import jax
import jax.numpy as jnp
from jax.experimental import pallas as pl
from jax.experimental.pallas import tpu as pltpu


def _focal_loss_kernel(logits_ref, target_ref, out_ref, acc_ref,
                       *, gamma: int, n: int):
    i = pl.program_id(0)

    # --- zero the running-sum accumulator on the first grid step ----------
    @pl.when(i == 0)
    def _init():
        acc_ref[...] = jnp.zeros_like(acc_ref)

    x = logits_ref[...].astype(jnp.float32)           # (TILE_N, C), f32 compute
    t = target_ref[...]                               # (TILE_N, 1) int32
    tn, c = x.shape

    # --- mask rows of the (possibly ragged) final tile ---------------------
    row = i * tn + jax.lax.broadcasted_iota(jnp.int32, (tn, 1), 0)   # (TILE_N,1)
    valid = row < n
    x = jnp.where(valid, x, 0.0)                      # keep padded rows finite

    # --- per-sample cross entropy: logsumexp(x) - x[target] ----------------
    m = jnp.max(x, axis=-1, keepdims=True)                                # (TILE_N,1)
    lse = m + jnp.log(jnp.sum(jnp.exp(x - m), axis=-1, keepdims=True))    # (TILE_N,1)

    classes = jax.lax.broadcasted_iota(jnp.int32, (tn, c), 1)             # (TILE_N,C)
    picked = jnp.sum(jnp.where(classes == t, x, 0.0),
                     axis=-1, keepdims=True)                              # (TILE_N,1)

    per_sample = jnp.where(valid, lse - picked, 0.0)                      # (TILE_N,1)

    # --- accumulate across grid steps --------------------------------------
    acc_ref[...] += jnp.sum(per_sample, axis=0, keepdims=True)            # (1,1)

    # --- finalize on the last step: mean CE + focal modulation -------------
    @pl.when(i == pl.num_programs(0) - 1)
    def _fin():
        logp = acc_ref[...] * (1.0 / float(n))        # (1,1): mean over true N
        p = jnp.exp(-logp)
        loss = (1.0 - p) ** gamma * logp              # static int gamma -> integer_pow
        out_ref[0, 0] = jnp.sum(loss)                 # scalar write to SMEM output


def _pick_tile_n(n: int, c: int, itemsize: int) -> int:
    """Largest row tile whose double-buffered inputs fit a conservative VMEM budget."""
    budget = 24 << 20                          # headroom under 32 MiB scoped / v7x 64 MiB
    per_row = 2 * (c * itemsize + 4)           # x2: BlockSpec double buffering (logits+tgt)
    tile = min(1024, max(8, budget // max(per_row, 1)))
    tile = max(8, (tile // 8) * 8)             # (8,128) sublane constraint
    n_pad = -(-n // 8) * 8
    return min(tile, n_pad)


def focal_loss(logits: jax.Array, target: jax.Array,
               gamma: int = 2, eps: float = 1e-7, tile_n=None) -> jax.Array:
    # NOTE: `eps` is declared by the PyTorch module but unused in its forward;
    # kept only for signature parity (do NOT fold it into the log).
    n, c = logits.shape
    t2 = target.astype(jnp.int32).reshape(n, 1)

    if tile_n is None:
        tile_n = _pick_tile_n(n, c, jnp.dtype(logits.dtype).itemsize)
    tile_n = max(8, (int(tile_n) // 8) * 8)
    grid = (pl.cdiv(n, tile_n),)

    out = pl.pallas_call(
        functools.partial(_focal_loss_kernel, gamma=int(gamma), n=n),
        out_shape=jax.ShapeDtypeStruct((1, 1), jnp.float32),
        grid=grid,
        in_specs=[
            pl.BlockSpec((tile_n, c), lambda i: (i, 0)),   # logits tile (native dtype)
            pl.BlockSpec((tile_n, 1), lambda i: (i, 0)),   # targets tile
        ],
        out_specs=pl.BlockSpec(memory_space=pltpu.SMEM),   # scalar result via SMEM
        scratch_shapes=[pltpu.VMEM((1, 1), jnp.float32)],  # running CE sum
        compiler_params=pltpu.CompilerParams(
            dimension_semantics=("arbitrary",)),           # grid axis is a reduction
    )(logits, t2)
    return out[0, 0]


def _focal_loss_ref(logits, target, gamma=2):
    # pure-JAX reference (mirrors torch.nn.CrossEntropyLoss + focal term)
    x = logits.astype(jnp.float32)
    lse = jax.nn.logsumexp(x, axis=-1)
    picked = jnp.take_along_axis(x, target[:, None], axis=-1)[:, 0]
    logp = jnp.mean(lse - picked)
    p = jnp.exp(-logp)
    return (1.0 - p) ** gamma * logp


if __name__ == "__main__":
    key = jax.random.PRNGKey(0)
    k1, k2 = jax.random.split(key)

    # Small shapes, but enough to exercise the grid + ragged final tile.
    N, C = 200, 32
    logits = jax.random.normal(k1, (N, C), dtype=jnp.float32)
    target = jax.random.randint(k2, (N,), 0, C, dtype=jnp.int32)

    # tile_n=64 -> 4 grid steps, last tile has only 8 valid rows (masking path).
    # Production shapes use the auto-sized tile (tile_n=None).
    out = focal_loss(logits, target, gamma=2, eps=1e-7, tile_n=64)
    out = jax.block_until_ready(out)

    ref = _focal_loss_ref(logits, target, gamma=2)
    assert jnp.allclose(out, ref, rtol=1e-5, atol=1e-6), (out, ref)

    print("KERNEL_OK")
</pallas_src>

<mosaic_0001>
module attributes {stable_mosaic.version = 11 : i64} {
  func.func @_focal_loss_kernel(%arg0: i32, %arg1: memref<64x32xf32, #tpu.memory_space<vmem>>, %arg2: memref<64x1xi32, #tpu.memory_space<vmem>>, %arg3: memref<1x1xf32, #tpu.memory_space<smem>>, %arg4: memref<1x1xf32, #tpu.memory_space<vmem>>) attributes {dimension_semantics = [#tpu.dimension_semantics<arbitrary>], iteration_bounds = array<i64: 4>, scalar_prefetch = 0 : i64, scratch_operands = 1 : i64, tpu.core_type = #tpu.core_type<tc>, window_params = [{transform_indices = @transform_0, window_bounds = array<i64: 64, 32>}, {transform_indices = @transform_1, window_bounds = array<i64: 64, 1>}, {transform_indices = @transform_2, window_bounds = array<i64: 1, 1>}]} {
    %c0_i32 = arith.constant 0 : i32
    %0 = arith.cmpi eq, %arg0, %c0_i32 : i32
    %1 = arith.extui %0 : i1 to i32
    %c0_i32_0 = arith.constant 0 : i32
    %2 = arith.cmpi ne, %1, %c0_i32_0 : i32
    scf.if %2 {
      %cst_15 = arith.constant 0.000000e+00 : f32
      %42 = vector.broadcast %cst_15 : f32 to vector<1x1xf32>
      %c0_16 = arith.constant 0 : index
      %c0_17 = arith.constant 0 : index
      %43 = vector.load %arg4[%c0_16, %c0_17] : memref<1x1xf32, #tpu.memory_space<vmem>>, vector<1x1xf32>
      tpu.vector_store %arg4[%c0_16, %c0_17], %42 {strides = array<i32>} : memref<1x1xf32, #tpu.memory_space<vmem>>, vector<1x1xf32>,
    } else {
    }
    %c0 = arith.constant 0 : index
    %c0_1 = arith.constant 0 : index
    %3 = vector.load %arg1[%c0, %c0_1] : memref<64x32xf32, #tpu.memory_space<vmem>>, vector<64x32xf32>
    %c0_2 = arith.constant 0 : index
    %c0_3 = arith.constant 0 : index
    %4 = vector.load %arg2[%c0_2, %c0_3] : memref<64x1xi32, #tpu.memory_space<vmem>>, vector<64x1xi32>
    %c64_i32 = arith.constant 64 : i32
    %5 = arith.muli %arg0, %c64_i32 : i32
    %6 = tpu.iota {dimensions = array<i32: 0>} : vector<64x1xi32>
    %7 = vector.broadcast %5 : i32 to vector<64x1xi32>
    %8 = arith.addi %7, %6 : vector<64x1xi32>
    %c200_i32 = arith.constant 200 : i32
    %9 = vector.broadcast %c200_i32 : i32 to vector<64x1xi32>
    %10 = arith.cmpi slt, %8, %9 : vector<64x1xi32>
    %cst = arith.constant 0.000000e+00 : f32
    %11 = vector.shape_cast %10 : vector<64x1xi1> to vector<64x1xi1>
    %12 = vector.broadcast %11 : vector<64x1xi1> to vector<64x32xi1>
    %13 = vector.broadcast %cst : f32 to vector<64x32xf32>
    %14 = arith.select %12, %3, %13 : vector<64x32xi1>, vector<64x32xf32>
    %cst_4 = arith.constant dense<0xFF800000> : vector<64xf32>
    %15 = vector.multi_reduction <maximumf>, %14, %cst_4 [1] : vector<64x32xf32> to vector<64xf32>
    %16 = vector.shape_cast %15 : vector<64xf32> to vector<64x1xf32>
    %17 = vector.broadcast %16 : vector<64x1xf32> to vector<64x32xf32>
    %18 = arith.subf %14, %17 : vector<64x32xf32>
    %19 = math.exp %18 : vector<64x32xf32>
    %cst_5 = arith.constant dense<0.000000e+00> : vector<64xf32>
    %20 = vector.multi_reduction <add>, %19, %cst_5 [1] : vector<64x32xf32> to vector<64xf32>
    %21 = vector.shape_cast %20 : vector<64xf32> to vector<64x1xf32>
    %22 = math.log %21 : vector<64x1xf32>
    %23 = arith.addf %16, %22 : vector<64x1xf32>
    %24 = tpu.iota {dimensions = array<i32: 1>} : vector<64x32xi32>
    %25 = vector.broadcast %4 : vector<64x1xi32> to vector<64x32xi32>
    %26 = arith.cmpi eq, %24, %25 : vector<64x32xi32>
    %cst_6 = arith.constant 0.000000e+00 : f32
    %27 = vector.broadcast %cst_6 : f32 to vector<64x32xf32>
    %28 = arith.select %26, %14, %27 : vector<64x32xi1>, vector<64x32xf32>
    %cst_7 = arith.constant dense<0.000000e+00> : vector<64xf32>
    %29 = vector.multi_reduction <add>, %28, %cst_7 [1] : vector<64x32xf32> to vector<64xf32>
    %30 = vector.shape_cast %29 : vector<64xf32> to vector<64x1xf32>
    %31 = arith.subf %23, %30 : vector<64x1xf32>
    %cst_8 = arith.constant 0.000000e+00 : f32
    %32 = vector.broadcast %cst_8 : f32 to vector<64x1xf32>
    %33 = arith.select %10, %31, %32 : vector<64x1xi1>, vector<64x1xf32>
    %c0_9 = arith.constant 0 : index
    %c0_10 = arith.constant 0 : index
    %34 = vector.load %arg4[%c0_9, %c0_10] : memref<1x1xf32, #tpu.memory_space<vmem>>, vector<1x1xf32>
    %cst_11 = arith.constant dense<0.000000e+00> : vector<1xf32>
    %35 = vector.multi_reduction <add>, %33, %cst_11 [0] : vector<64x1xf32> to vector<1xf32>
    %36 = vector.shape_cast %35 : vector<1xf32> to vector<1x1xf32>
    %37 = arith.addf %34, %36 : vector<1x1xf32>
    %c0_12 = arith.constant 0 : index
    %c0_13 = arith.constant 0 : index
    %38 = vector.load %arg4[%c0_12, %c0_13] : memref<1x1xf32, #tpu.memory_space<vmem>>, vector<1x1xf32>
    tpu.vector_store %arg4[%c0_12, %c0_13], %37 {strides = array<i32>} : memref<1x1xf32, #tpu.memory_space<vmem>>, vector<1x1xf32>,
    %c3_i32 = arith.constant 3 : i32
    %39 = arith.cmpi eq, %arg0, %c3_i32 : i32
    %40 = arith.extui %39 : i1 to i32
    %c0_i32_14 = arith.constant 0 : i32
    %41 = arith.cmpi ne, %40, %c0_i32_14 : i32
    scf.if %41 {
      %c0_15 = arith.constant 0 : index
      %c0_16 = arith.constant 0 : index
      %42 = vector.load %arg4[%c0_15, %c0_16] : memref<1x1xf32, #tpu.memory_space<vmem>>, vector<1x1xf32>
      %cst_17 = arith.constant 5.000000e-03 : f32
      %43 = vector.broadcast %cst_17 : f32 to vector<1x1xf32>
      %44 = arith.mulf %42, %43 : vector<1x1xf32>
      %cst_18 = arith.constant 0.000000e+00 : f32
      %45 = vector.broadcast %cst_18 : f32 to vector<1x1xf32>
      %46 = arith.subf %45, %44 : vector<1x1xf32>
      %47 = math.exp %46 : vector<1x1xf32>
      %cst_19 = arith.constant 1.000000e+00 : f32
      %48 = vector.broadcast %cst_19 : f32 to vector<1x1xf32>
      %49 = arith.subf %48, %47 : vector<1x1xf32>
      %50 = arith.mulf %49, %49 : vector<1x1xf32>
      %51 = arith.mulf %50, %44 : vector<1x1xf32>
      %52 = vector.shape_cast %51 : vector<1x1xf32> to vector<1x1x1xf32>
      %cst_20 = arith.constant dense<0.000000e+00> : vector<1xf32>
      %53 = vector.multi_reduction <add>, %52, %cst_20 [1, 2] : vector<1x1x1xf32> to vector<1xf32>
      %54 = vector.shape_cast %53 : vector<1xf32> to vector<1x1x1xf32>
      %55 = vector.extract %54[0, 0, 0] : f32 from vector<1x1x1xf32>
      %c0_21 = arith.constant 0 : index
      %c0_22 = arith.constant 0 : index
      %56 = memref.load %arg3[%c0_21, %c0_22] : memref<1x1xf32, #tpu.memory_space<smem>>
      memref.store %55, %arg3[%c0_21, %c0_22] : memref<1x1xf32, #tpu.memory_space<smem>>
    } else {
    }
    return
  }
  func.func @transform_0(%arg0: i32) -> (i32, i32) {
    %c0_i32 = arith.constant 0 : i32
    %c0_i32_0 = arith.constant 0 : i32
    return %arg0, %c0_i32 : i32, i32
  }
  func.func @transform_1(%arg0: i32) -> (i32, i32) {
    %c0_i32 = arith.constant 0 : i32
    %c0_i32_0 = arith.constant 0 : i32
    return %arg0, %c0_i32 : i32, i32
  }
  func.func @transform_2(%arg0: i32) -> (i32, i32) {
    %c0_i32 = arith.constant 0 : i32
    %c0_i32_0 = arith.constant 0 : i32
    %c0_i32_1 = arith.constant 0 : i32
    return %c0_i32, %c0_i32_0 : i32, i32
  }
}

</mosaic_0001>

<llo_original>
// kernel: tpu_custom_call.1
$region0: #{tpu_custom_call.1}
  #allocation0 [shape = 'u32[]', space=smem, size = 0x4, offset = 0x4, fixed_abs, tag = 'smem constant byte address 0x4 - core index']
  #allocation1 [shape = 'u32[144,128]{1,0:T(1,128)}', space=vmem, size = 0x12000, scoped, tag = 'internal scratch']
  #allocation2 [shape = 'f32[1,1]{1,0:T(1,128)}', space=vmem, size = 0x200, scoped, tag = 'scratch operand']
  %s0 = inlined_call_operand.vmem [shape: f32[200,32], index: 0, kind: input, shape index: {}]
  %s1 = inlined_call_operand.vmem [shape: s32[200,1], index: 1, kind: input, shape index: {}]
  %s2 = inlined_call_operand.hbm [shape: f32[1,1], index: 2, kind: output, shape index: {}]
  %s3 = sld [smem:[#allocation0]]
  $region49: #{tpu_custom_call.1} parent=0
    _
  %s5 = ssub.s32 1, %s3
  %s6 = scalar_select 0, %s5, %s3
  $region1: #{tpu_custom_call.1} parent=0
    #allocation3 [shape = 'u8[512]{0}', space=smem, size = 0x200, scoped, tag = 'output window, operand 0, single buffered']
    #allocation4 [shape = 's32[2]{0}', space=sflag, size = 0x8, scoped, tag = 'scoped memory for tpu_custom_call.1']
    %7 = vsyncpa [#allocation4], 0
    loop: start=0, step=1, limit=6
    $region2: #{tpu_custom_call.1} parent=1 // loop_pre_header
      _
    $region3: #{tpu_custom_call.1} parent=1 // loop_header
      %s9 = sphi 0, %s13
      %p10 = scmp.ge.s32.totalorder %s9, 6
      %s19 = sphi 0, %s21
      %s22 = sphi 0, %s19
      %s23 = sphi 0, %s22
      %s39 = sphi 0, %s23
      %s45 = sphi 0, %s47
      %s48 = sphi 0, %s45
      %s49 = sphi 0, %s48
      %s65 = sphi 0, %s49
      %s69 = sphi 0, %s69
      %s71 = sphi 0, %s69
      %s72 = sphi 0, %s71
      %s86 = sphi 0, %s72
    $region4: #{tpu_custom_call.1} parent=1 // loop_header_branch
      %12 = sbr.rel (%p10) target = $region8
    $region5: #{tpu_custom_call.1} parent=1 // loop_body
      %s14 = ssub.s32 %s9, 1
      %s15 = ssub.s32 %s9, 2
      %s16 = sadd.s32 %s9, 1
      %s17 = ssub.s32 %s9, %s16
      %p18 = scmp.eq.s32.totalorder %s17, 0
      %s20 = sadd.s32 %s19, 1
      %s21 = scalar_select %p18, %s19, %s20
      %p24 = pneg %p18
      %p25 = scmp.eq.s32.totalorder %s9, 3
      %p26 = por %p24, %p25
      %p27 = scmp.ne.s32.totalorder %s19, %s22
      %p28 = scmp.eq.s32.totalorder %s9, 0
      %p29 = por %p27, %p28
      %p30 = scmp.ne.s32.totalorder %s19, %s22
      %p31 = scmp.eq.s32.totalorder %s14, 3
      %p32 = por %p30, %p31
      %p33 = scmp.ne.s32.totalorder %s22, %s23
      %p34 = scmp.eq.s32.totalorder %s14, 0
      %p35 = por %p33, %p34
      %p36 = scmp.ne.s32.totalorder %s22, %s23
      %p37 = scmp.eq.s32.totalorder %s15, 3
      %p38 = por %p36, %p37
      %p40 = scmp.ne.s32.totalorder %s23, %s39
      %p41 = scmp.eq.s32.totalorder %s15, 0
      %p42 = por %p40, %p41
      %s43 = ssub.s32 %s9, %s16
      %p44 = scmp.eq.s32.totalorder %s43, 0
      %s46 = sadd.s32 %s45, 1
      %s47 = scalar_select %p44, %s45, %s46
      %p50 = pneg %p44
      %p51 = scmp.eq.s32.totalorder %s9, 3
      %p52 = por %p50, %p51
      %p53 = scmp.ne.s32.totalorder %s45, %s48
      %p54 = scmp.eq.s32.totalorder %s9, 0
      %p55 = por %p53, %p54
      %p56 = scmp.ne.s32.totalorder %s45, %s48
      %p57 = scmp.eq.s32.totalorder %s14, 3
      %p58 = por %p56, %p57
      %p59 = scmp.ne.s32.totalorder %s48, %s49
      %p60 = scmp.eq.s32.totalorder %s14, 0
      %p61 = por %p59, %p60
      %p62 = scmp.ne.s32.totalorder %s48, %s49
      %p63 = scmp.eq.s32.totalorder %s15, 3
      %p64 = por %p62, %p63
      %p66 = scmp.ne.s32.totalorder %s49, %s65
      %p67 = scmp.eq.s32.totalorder %s15, 0
      %p68 = por %p66, %p67
      %s70 = sadd.s32 %s69, 1
      %p73 = scmp.eq.s32.totalorder %s9, 3
      %p74 = scmp.ne.s32.totalorder %s69, %s71
      %p75 = scmp.eq.s32.totalorder %s9, 0
      %p76 = por %p74, %p75
      %p77 = scmp.ne.s32.totalorder %s69, %s71
      %p78 = scmp.eq.s32.totalorder %s14, 3
      %p79 = por %p77, %p78
      %p80 = scmp.ne.s32.totalorder %s71, %s72
      %p81 = scmp.eq.s32.totalorder %s14, 0
      %p82 = por %p80, %p81
      %p83 = scmp.ne.s32.totalorder %s71, %s72
      %p84 = scmp.eq.s32.totalorder %s15, 3
      %p85 = por %p83, %p84
      %p87 = scmp.ne.s32.totalorder %s72, %s86
      %p88 = scmp.eq.s32.totalorder %s15, 0
      %p89 = por %p87, %p88
      %p90 = scmp.le.s32.totalorder 1, %s9
      %p91 = scmp.lt.s32.totalorder %s9, 5
      %p92 = pnand %p90, %p91
      %p93 = pneg %p92
      // Predicated region
      $region9: #{tpu_custom_call.1} parent=5 // pred_check
        _
      $region10: #{tpu_custom_call.1} parent=5 // pred_check_branch
        %95 = sbr.rel (%p92) target = $region12
      $region11: #{tpu_custom_call.1} parent=5 // pred_region
        %s96 = ssub.s32 %s9, 1
      $region12: #{tpu_custom_call.1} parent=5 // pred_fallthru
        _
      %p97 = scmp.lt.s32.totalorder %s9, 4
      // Predicated region
      $region13: #{tpu_custom_call.1} parent=5 // pred_check
        %p98 = pneg %p97
      $region14: #{tpu_custom_call.1} parent=5 // pred_check_branch
        %100 = sbr.rel (%p98) target = $region16
      $region15: #{tpu_custom_call.1} parent=5 // pred_region
        // Predicated region
        $region17: #{tpu_custom_call.1} parent=15 // pred_check
          %p101 = pneg %p29
        $region18: #{tpu_custom_call.1} parent=15 // pred_check_branch
          %103 = sbr.rel (%p101) target = $region20
        $region19: #{tpu_custom_call.1} parent=15 // pred_region
          %s104 = smul.u32 8, %s9
          %s105 = ssub.s32 25, %s104
          %p106 = scmp.lt.s32.totalorder %s105, 8
          %s107 = scalar_select %p106, %s105, 8
          %s108 = smul.u32 128, %s107
          %p109 = scmp.lt.s32.totalorder %s104, 24
          %s110 = scalar_select %p109, %s104, 24
          %s111 = smul.addr %s110, 8
          %s112 = scalar_lea.vmem %s0, %s111
          %s113 = smul.u32 8, %s9
          %s114 = ssub.s32 25, %s113
          %p115 = scmp.lt.s32.totalorder %s114, 8
          %s116 = scalar_select %p115, %s114, 8
          %s117 = smul.u32 128, %s116
        $region20: #{tpu_custom_call.1} parent=15 // pred_fallthru
          _
        // Predicated region
        $region21: #{tpu_custom_call.1} parent=15 // pred_check
          %p118 = pneg %p55
        $region22: #{tpu_custom_call.1} parent=15 // pred_check_branch
          %120 = sbr.rel (%p118) target = $region24
        $region23: #{tpu_custom_call.1} parent=15 // pred_region
          %s121 = smul.u32 8, %s9
          %s122 = ssub.s32 25, %s121
          %p123 = scmp.lt.s32.totalorder %s122, 8
          %s124 = scalar_select %p123, %s122, 8
          %s125 = smul.u32 128, %s124
          %p126 = scmp.lt.s32.totalorder %s121, 24
          %s127 = scalar_select %p126, %s121, 24
          %s128 = smul.addr %s127, 8
          %s129 = scalar_lea.vmem %s1, %s128
          %s130 = smul.u32 8, %s9
          %s131 = ssub.s32 25, %s130
          %p132 = scmp.lt.s32.totalorder %s131, 8
          %s133 = scalar_select %p132, %s131, 8
          %s134 = smul.u32 128, %s133
        $region24: #{tpu_custom_call.1} parent=15 // pred_fallthru
          _
      $region16: #{tpu_custom_call.1} parent=5 // pred_fallthru
        _
      %p135 = scmp.le.s32.totalorder 1, %s9
      %p136 = scmp.lt.s32.totalorder %s9, 5
      %p137 = pnand %p135, %p136
      %p138 = pneg %p137
      // Predicated region
      $region25: #{tpu_custom_call.1} parent=5 // pred_check
        _
      $region26: #{tpu_custom_call.1} parent=5 // pred_check_branch
        %140 = sbr.rel (%p137) target = $region28
      $region27: #{tpu_custom_call.1} parent=5 // pred_region
        %s141 = ssub.s32 %s9, 1
        %s142 = smul.u32 8, %s14
        %s143 = ssub.s32 25, %s142
        %p144 = scmp.lt.s32.totalorder %s143, 8
        %s145 = scalar_select %p144, %s143, 8
        %s146 = smul.u32 128, %s145
        %p147 = scmp.lt.s32.totalorder %s142, 24
        %s148 = scalar_select %p147, %s142, 24
        %s149 = smul.addr %s148, 8
        %s150 = scalar_lea.vmem %s0, %s149
        %p151 = pneg %p35
        %p152 = pneg %p32
        %s153 = smul.u32 8, %s14
        %s154 = ssub.s32 25, %s153
        %p155 = scmp.lt.s32.totalorder %s154, 8
        %s156 = scalar_select %p155, %s154, 8
        %s157 = smul.u32 128, %s156
        %p158 = scmp.lt.s32.totalorder %s153, 24
        %s159 = scalar_select %p158, %s153, 24
        %s160 = smul.addr %s159, 8
        %s161 = scalar_lea.vmem %s1, %s160
        %p162 = pneg %p61
        %p163 = pneg %p58
        %p164 = pneg %p82
        %p165 = pneg %p79
        %s166 = smul.u32 8, %s14
        %s167 = ssub.s32 25, %s166
        %p168 = scmp.lt.s32.totalorder %s167, 8
        %s169 = scalar_select %p168, %s167, 8
        %s170 = smul.u32 128, %s169
        %p171 = scmp.lt.s32.totalorder %s166, 24
        %s172 = scalar_select %p171, %s166, 24
        %s173 = smul.addr %s172, 8
        %s174 = scalar_lea.vmem %s0, %s173
        %s175 = smul.u32 8, %s14
        %s176 = ssub.s32 25, %s175
        %p177 = scmp.lt.s32.totalorder %s176, 8
        %s178 = scalar_select %p177, %s176, 8
        %s179 = smul.u32 128, %s178
        %s180 = smul.u32 8, %s14
        %s181 = ssub.s32 25, %s180
        %p182 = scmp.lt.s32.totalorder %s181, 8
        %s183 = scalar_select %p182, %s181, 8
        %s184 = smul.u32 128, %s183
        %p185 = scmp.lt.s32.totalorder %s180, 24
        %s186 = scalar_select %p185, %s180, 24
        %s187 = smul.addr %s186, 8
        %s188 = scalar_lea.vmem %s1, %s187
        %s189 = smul.u32 8, %s14
        %s190 = ssub.s32 25, %s189
        %p191 = scmp.lt.s32.totalorder %s190, 8
        %s192 = scalar_select %p191, %s190, 8
        %s193 = smul.u32 128, %s192
        %p194 = scmp.eq.s32.totalorder %s14, 0
        // Predicated region
        $region29: #{tpu_custom_call.1} parent=27 // pred_check
          %p195 = pneg %p194
        $region30: #{tpu_custom_call.1} parent=27 // pred_check_branch
          %197 = sbr.rel (%p195) target = $region32
        $region31: #{tpu_custom_call.1} parent=27 // pred_region
          %vm198 = vcmask 0
          %199 = vst.msk [vmem:[#allocation2] sm:$0x1] %vm198, 0.0
        $region32: #{tpu_custom_call.1} parent=27 // pred_fallthru
          _
        %v200 = vld [vmem:[%s174] sm:$0xff]
        %v201 = vld [vmem:[%s174 + $0x8] sm:$0xff]
        %v202 = vld [vmem:[%s174 + $0x10] sm:$0xff]
        %v203 = vld [vmem:[%s174 + $0x18] sm:$0xff]
        %v204 = vld [vmem:[%s174 + $0x20] sm:$0xff]
        %v205 = vld [vmem:[%s174 + $0x28] sm:$0xff]
        %v206 = vld [vmem:[%s174 + $0x30] sm:$0xff]
        %v207 = vld [vmem:[%s174 + $0x38] sm:$0xff]
        %v208 = vld [vmem:[%s188] sm:$0xff]
        %v209 = vld [vmem:[%s188 + $0x8] sm:$0xff]
        %v210 = vld [vmem:[%s188 + $0x10] sm:$0xff]
        %v211 = vld [vmem:[%s188 + $0x18] sm:$0xff]
        %v212 = vld [vmem:[%s188 + $0x20] sm:$0xff]
        %v213 = vld [vmem:[%s188 + $0x28] sm:$0xff]
        %v214 = vld [vmem:[%s188 + $0x30] sm:$0xff]
        %v215 = vld [vmem:[%s188 + $0x38] sm:$0xff]
        %s216 = smul.u32 %s14, 64
        %v217 = vlaneseq
        %v218 = vshrl.u32 %v217, 7
        %v219 = vadd.s32 %v218, 8
        %v220 = vadd.s32 %v218, 16
        %v221 = vadd.s32 %v218, 24
        %v222 = vadd.s32 %v218, 32
        %v223 = vadd.s32 %v218, 40
        %v224 = vadd.s32 %v218, 48
        %v225 = vadd.s32 %v218, 56
        %v226 = vstv %s216
        %v227 = vadd.s32 %v226, %v218
        %v228 = vadd.s32 %v226, %v219
        %v229 = vadd.s32 %v226, %v220
        %v230 = vadd.s32 %v226, %v221
        %v231 = vadd.s32 %v226, %v222
        %v232 = vadd.s32 %v226, %v223
        %v233 = vadd.s32 %v226, %v224
        %v234 = vadd.s32 %v226, %v225
        %vm235 = vcmp.lt.s32.totalorder %v227, 200
        %vm236 = vcmp.lt.s32.totalorder %v228, 200
        %vm237 = vcmp.lt.s32.totalorder %v229, 200
        %vm238 = vcmp.lt.s32.totalorder %v230, 200
        %vm239 = vcmp.lt.s32.totalorder %v231, 200
        %vm240 = vcmp.lt.s32.totalorder %v232, 200
        %vm241 = vcmp.lt.s32.totalorder %v233, 200
        %vm242 = vcmp.lt.s32.totalorder %v234, 200
        %v243 = vsel %vm235, 1, 0
        %v244 = vsel %vm236, 1, 0
        %v245 = vsel %vm237, 1, 0
        %v246 = vsel %vm238, 1, 0
        %v247 = vsel %vm239, 1, 0
        %v248 = vsel %vm240, 1, 0
        %v249 = vsel %vm241, 1, 0
        %v250 = vsel %vm242, 1, 0
        %vm251 = vcmp.eq.s32.totalorder %v243, 1
        %vm252 = vcmp.eq.s32.totalorder %v244, 1
        %vm253 = vcmp.eq.s32.totalorder %v245, 1
        %vm254 = vcmp.eq.s32.totalorder %v246, 1
        %vm255 = vcmp.eq.s32.totalorder %v247, 1
        %vm256 = vcmp.eq.s32.totalorder %v248, 1
        %vm257 = vcmp.eq.s32.totalorder %v249, 1
        %vm258 = vcmp.eq.s32.totalorder %v250, 1
        %v259 = vsel %vm251, %v200, 0.0
        %v260 = vsel %vm252, %v201, 0.0
        %v261 = vsel %vm253, %v202, 0.0
        %v262 = vsel %vm254, %v203, 0.0
        %v263 = vsel %vm255, %v204, 0.0
        %v264 = vsel %vm256, %v205, 0.0
        %v265 = vsel %vm257, %v206, 0.0
        %v266 = vsel %vm258, %v207, 0.0
        %vm267 = vcmask 261120
        %v268 = vsel %vm267, %v259, -inf
        %269 = vmax.xlane.f32.xlu0 %v268
        %v270 = vpop.xlane.xlu0 %269
        %v271 = vsel %vm267, %v260, -inf
        %272 = vmax.xlane.f32.xlu0 %v271
        %v273 = vpop.xlane.xlu0 %272
        %v274 = vsel %vm267, %v261, -inf
        %275 = vmax.xlane.f32.xlu0 %v274
        %v276 = vpop.xlane.xlu0 %275
        %v277 = vsel %vm267, %v262, -inf
        %278 = vmax.xlane.f32.xlu0 %v277
        %v279 = vpop.xlane.xlu0 %278
        %v280 = vsel %vm267, %v263, -inf
        %281 = vmax.xlane.f32.xlu0 %v280
        %v282 = vpop.xlane.xlu0 %281
        %v283 = vsel %vm267, %v264, -inf
        %284 = vmax.xlane.f32.xlu0 %v283
        %v285 = vpop.xlane.xlu0 %284
        %v286 = vsel %vm267, %v265, -inf
        %287 = vmax.xlane.f32.xlu0 %v286
        %v288 = vpop.xlane.xlu0 %287
        %v289 = vsel %vm267, %v266, -inf
        %290 = vmax.xlane.f32.xlu0 %v289
        %v291 = vpop.xlane.xlu0 %290
        %v292 = vsub.f32 %v259, %v270
        %v293 = vsub.f32 %v260, %v273
        %v294 = vsub.f32 %v261, %v276
        %v295 = vsub.f32 %v262, %v279
        %v296 = vsub.f32 %v263, %v282
        %v297 = vsub.f32 %v264, %v285
        %v298 = vsub.f32 %v265, %v288
        %v299 = vsub.f32 %v266, %v291
        %v300 = vmul.f32 %v292, 1.442695
        %v301 = vpow.pop %v300
        %v302 = vmul.f32 %v293, 1.442695
        %v303 = vpow.pop %v302
        %v304 = vmul.f32 %v294, 1.442695
        %v305 = vpow.pop %v304
        %v306 = vmul.f32 %v295, 1.442695
        %v307 = vpow.pop %v306
        %v308 = vmul.f32 %v296, 1.442695
        %v309 = vpow.pop %v308
        %v310 = vmul.f32 %v297, 1.442695
        %v311 = vpow.pop %v310
        %v312 = vmul.f32 %v298, 1.442695
        %v313 = vpow.pop %v312
        %v314 = vmul.f32 %v299, 1.442695
        %v315 = vpow.pop %v314
        %v316 = vsel %vm267, %v301, 0.0
        %317 = vadd.xlane.f32.xlu0 %v316
        %v318 = vpop.xlane.xlu0 %317
        %v319 = vsel %vm267, %v303, 0.0
        %320 = vadd.xlane.f32.xlu0 %v319
        %v321 = vpop.xlane.xlu0 %320
        %v322 = vsel %vm267, %v305, 0.0
        %323 = vadd.xlane.f32.xlu0 %v322
        %v324 = vpop.xlane.xlu0 %323
        %v325 = vsel %vm267, %v307, 0.0
        %326 = vadd.xlane.f32.xlu0 %v325
        %v327 = vpop.xlane.xlu0 %326
        %v328 = vsel %vm267, %v309, 0.0
        %329 = vadd.xlane.f32.xlu0 %v328
        %v330 = vpop.xlane.xlu0 %329
        %v331 = vsel %vm267, %v311, 0.0
        %332 = vadd.xlane.f32.xlu0 %v331
        %v333 = vpop.xlane.xlu0 %332
        %v334 = vsel %vm267, %v313, 0.0
        %335 = vadd.xlane.f32.xlu0 %v334
        %v336 = vpop.xlane.xlu0 %335
        %v337 = vsel %vm267, %v315, 0.0
        %338 = vadd.xlane.f32.xlu0 %v337
        %v339 = vpop.xlane.xlu0 %338
        %v340 = vlog2.pop %v318
        %v341 = vmul.f32 %v340, 0.6931472
        %v342 = vlog2.pop %v321
        %v343 = vmul.f32 %v342, 0.6931472
        %v344 = vlog2.pop %v324
        %v345 = vmul.f32 %v344, 0.6931472
        %v346 = vlog2.pop %v327
        %v347 = vmul.f32 %v346, 0.6931472
        %v348 = vlog2.pop %v330
        %v349 = vmul.f32 %v348, 0.6931472
        %v350 = vlog2.pop %v333
        %v351 = vmul.f32 %v350, 0.6931472
        %v352 = vlog2.pop %v336
        %v353 = vmul.f32 %v352, 0.6931472
        %v354 = vlog2.pop %v339
        %v355 = vmul.f32 %v354, 0.6931472
        %v356 = vadd.f32 %v270, %v341
        %v357 = vadd.f32 %v273, %v343
        %v358 = vadd.f32 %v276, %v345
        %v359 = vadd.f32 %v279, %v347
        %v360 = vadd.f32 %v282, %v349
        %v361 = vadd.f32 %v285, %v351
        %v362 = vadd.f32 %v288, %v353
        %v363 = vadd.f32 %v291, %v355
        %v364 = vlaneseq
        %v365 = vand.u32 %v364, 127
        %366 = vset.pattern.permute.xlu0 0
        %367 = vperm.xlu0 %366, %v208
        %v368 = vpop.permute.xlu0 %367
        %369 = vset.pattern.permute.xlu0 0
        %370 = vperm.xlu0 %369, %v209
        %v371 = vpop.permute.xlu0 %370
        %372 = vset.pattern.permute.xlu0 0
        %373 = vperm.xlu0 %372, %v210
        %v374 = vpop.permute.xlu0 %373
        %375 = vset.pattern.permute.xlu0 0
        %376 = vperm.xlu0 %375, %v211
        %v377 = vpop.permute.xlu0 %376
        %378 = vset.pattern.permute.xlu0 0
        %379 = vperm.xlu0 %378, %v212
        %v380 = vpop.permute.xlu0 %379
        %381 = vset.pattern.permute.xlu0 0
        %382 = vperm.xlu0 %381, %v213
        %v383 = vpop.permute.xlu0 %382
        %384 = vset.pattern.permute.xlu0 0
        %385 = vperm.xlu0 %384, %v214
        %v386 = vpop.permute.xlu0 %385
        %387 = vset.pattern.permute.xlu0 0
        %388 = vperm.xlu0 %387, %v215
        %v389 = vpop.permute.xlu0 %388
        %vm390 = vcmp.eq.s32.totalorder %v365, %v368
        %vm391 = vcmp.eq.s32.totalorder %v365, %v371
        %vm392 = vcmp.eq.s32.totalorder %v365, %v374
        %vm393 = vcmp.eq.s32.totalorder %v365, %v377
        %vm394 = vcmp.eq.s32.totalorder %v365, %v380
        %vm395 = vcmp.eq.s32.totalorder %v365, %v383
        %vm396 = vcmp.eq.s32.totalorder %v365, %v386
        %vm397 = vcmp.eq.s32.totalorder %v365, %v389
        %v398 = vsel %vm390, %v259, 0.0
        %v399 = vsel %vm391, %v260, 0.0
        %v400 = vsel %vm392, %v261, 0.0
        %v401 = vsel %vm393, %v262, 0.0
        %v402 = vsel %vm394, %v263, 0.0
        %v403 = vsel %vm395, %v264, 0.0
        %v404 = vsel %vm396, %v265, 0.0
        %v405 = vsel %vm397, %v266, 0.0
        %v406 = vsel %vm267, %v398, 0.0
        %407 = vadd.xlane.f32.xlu0 %v406
        %v408 = vpop.xlane.xlu0 %407
        %v409 = vsel %vm267, %v399, 0.0
        %410 = vadd.xlane.f32.xlu0 %v409
        %v411 = vpop.xlane.xlu0 %410
        %v412 = vsel %vm267, %v400, 0.0
        %413 = vadd.xlane.f32.xlu0 %v412
        %v414 = vpop.xlane.xlu0 %413
        %v415 = vsel %vm267, %v401, 0.0
        %416 = vadd.xlane.f32.xlu0 %v415
        %v417 = vpop.xlane.xlu0 %416
        %v418 = vsel %vm267, %v402, 0.0
        %419 = vadd.xlane.f32.xlu0 %v418
        %v420 = vpop.xlane.xlu0 %419
        %v421 = vsel %vm267, %v403, 0.0
        %422 = vadd.xlane.f32.xlu0 %v421
        %v423 = vpop.xlane.xlu0 %422
        %v424 = vsel %vm267, %v404, 0.0
        %425 = vadd.xlane.f32.xlu0 %v424
        %v426 = vpop.xlane.xlu0 %425
        %v427 = vsel %vm267, %v405, 0.0
        %428 = vadd.xlane.f32.xlu0 %v427
        %v429 = vpop.xlane.xlu0 %428
        %v430 = vsub.f32 %v356, %v408
        %v431 = vsub.f32 %v357, %v411
        %v432 = vsub.f32 %v358, %v414
        %v433 = vsub.f32 %v359, %v417
        %v434 = vsub.f32 %v360, %v420
        %v435 = vsub.f32 %v361, %v423
        %v436 = vsub.f32 %v362, %v426
        %v437 = vsub.f32 %v363, %v429
        %v438 = vsel %vm235, %v430, 0.0
        %v439 = vsel %vm236, %v431, 0.0
        %v440 = vsel %vm237, %v432, 0.0
        %v441 = vsel %vm238, %v433, 0.0
        %v442 = vsel %vm239, %v434, 0.0
        %v443 = vsel %vm240, %v435, 0.0
        %v444 = vsel %vm241, %v436, 0.0
        %v445 = vsel %vm242, %v437, 0.0
        %v446 = vld [vmem:[#allocation2] sm:$0x1]
        %v447 = vadd.f32 %v438, %v439
        %v448 = vadd.f32 %v447, %v440
        %v449 = vadd.f32 %v448, %v441
        %v450 = vadd.f32 %v449, %v442
        %v451 = vadd.f32 %v450, %v443
        %v452 = vadd.f32 %v451, %v444
        %v453 = vadd.f32 %v452, %v445
        %v454 = vrot.slane %v453, 4
        %v455 = vadd.f32 %v453, %v454
        %v456 = vrot.slane %v455, 2
        %v457 = vadd.f32 %v455, %v456
        %v458 = vrot.slane %v457, 1
        %v459 = vadd.f32 %v457, %v458
        %v460 = vadd.f32 %v446, %v459
        %vm461 = vcmask 0
        %462 = vst.msk [vmem:[#allocation2] sm:$0x1] %vm461, %v460
        %p463 = scmp.eq.s32.totalorder %s14, 3
        // Predicated region
        $region33: #{tpu_custom_call.1} parent=27 // pred_check
          %p464 = pneg %p463
        $region34: #{tpu_custom_call.1} parent=27 // pred_check_branch
          %466 = sbr.rel (%p464) target = $region36
        $region35: #{tpu_custom_call.1} parent=27 // pred_region
          %v467 = vld [vmem:[#allocation2] sm:$0x1]
          %v468 = vmul.f32 %v467, 0.005
          %v469 = vsub.f32 0.0, %v468
          %v470 = vmul.f32 %v469, 1.442695
          %v471 = vpow.pop %v470
          %v472 = vsub.f32 1.0, %v471
          %v473 = vmul.f32 %v472, %v472
          %v474 = vmul.f32 %v473, %v468
          %v475 = vadd.f32 %v474, 0.0
          %s476 = vtos %v475
          %s477 = scalar_lea.smem [#allocation3], 0
          %478 = sst [smem:[%s477]] %s476
        $region36: #{tpu_custom_call.1} parent=27 // pred_fallthru
          _
        // Predicated region
        $region37: #{tpu_custom_call.1} parent=27 // pred_check
          %p479 = pneg %p79
        $region38: #{tpu_custom_call.1} parent=27 // pred_check_branch
          %481 = sbr.rel (%p479) target = $region40
        $region39: #{tpu_custom_call.1} parent=27 // pred_region
          %s483 = ssub.s32 16, 16
          %484 = vsyncadd [#allocation4], %s483
          %487 = dma.smem_to_hbm [#allocation3], 16, %s2, [#allocation4]
        $region40: #{tpu_custom_call.1} parent=27 // pred_fallthru
          _
        // Predicated region
        $region41: #{tpu_custom_call.1} parent=27 // pred_check
          %p488 = pneg %p79
        $region42: #{tpu_custom_call.1} parent=27 // pred_check_branch
          %490 = sbr.rel (%p488) target = $region44
        $region43: #{tpu_custom_call.1} parent=27 // pred_region
          %491 = dma.done [#allocation4], 16
        $region44: #{tpu_custom_call.1} parent=27 // pred_fallthru
          _
        %492 = sfence
      $region28: #{tpu_custom_call.1} parent=5 // pred_fallthru
        _
      %p493 = scmp.le.s32.totalorder 2, %s9
      // Predicated region
      $region45: #{tpu_custom_call.1} parent=5 // pred_check
        %p494 = pneg %p493
      $region46: #{tpu_custom_call.1} parent=5 // pred_check_branch
        %496 = sbr.rel (%p494) target = $region48
      $region47: #{tpu_custom_call.1} parent=5 // pred_region
        %s497 = ssub.s32 %s9, 2
      $region48: #{tpu_custom_call.1} parent=5 // pred_fallthru
        _
    $region6: #{tpu_custom_call.1} parent=1 // loop_footer
      %s13 = sadd.s32 1, %s9
    $region7: #{tpu_custom_call.1} parent=1 // loop_footer_branch
      %8 = sbr.rel target = $region3
    $region8: #{tpu_custom_call.1} parent=1 // loop_exit
      _
    %498 = vsyncpa [#allocation4], 1
    %s499 = scalar_lea.sflag [#allocation4], 1
    %500 = vsyncpa %s499, 1

</llo_original>
